<compile_context>
chip_gen: v7x
topology: tpu7x:2x2x1
jax: 0.10.0
libtpu: 0.0.40
codegen_flags: <defaults>
</compile_context>

<pallas_src>
import functools

import jax
import jax.numpy as jnp
from jax import lax
from jax.experimental import pallas as pl
from jax.experimental.pallas import tpu as pltpu

EPS = 1e-5
LEAKY_SLOPE = 0.01
LANE = 128


def _round_up(x, m):
    return (x + m - 1) // m * m


# ---------------------------------------------------------------------------
# Small-N fast path: one grid-less kernel, everything VMEM-resident.
# Uses centered (two-pass-in-VMEM) variance for better numerics.
# ---------------------------------------------------------------------------
def _fused_kernel(x_ref, w_ref, w1_ref, b1_ref, w2_ref, b2_ref, o_ref,
                  *, n_rows, out_pad):
    h = jnp.dot(x_ref[...], w1_ref[...],
                preferred_element_type=jnp.float32) + b1_ref[...]
    h = jnp.where(h >= 0, h, LEAKY_SLOPE * h)

    inv_n = 1.0 / float(n_rows)
    mean = jnp.sum(h, axis=0, keepdims=True) * inv_n
    hc = h - mean
    var = jnp.sum(hc * hc, axis=0, keepdims=True) * inv_n
    inv_std = lax.rsqrt(var + EPS)

    style = jnp.dot(w_ref[...], w2_ref[...],
                    preferred_element_type=jnp.float32) + b2_ref[...]
    gamma = style[:, :out_pad]
    beta = style[:, out_pad:]

    o_ref[...] = (gamma * (hc * inv_std) + beta).astype(o_ref.dtype)


# ---------------------------------------------------------------------------
# Pass 1 (tiled path): per N-tile, h = leaky_relu(x @ W1 + b1); accumulate
# per-channel sum / sum-of-squares into two VMEM-resident (1, out_pad)
# outputs, finalized to (mean, inv_std) on the last grid step.
# ---------------------------------------------------------------------------
def _pass1_kernel(x_ref, w1_ref, b1_ref, sum_ref, sq_ref,
                  *, n_rows, tile_n, ragged):
    i = pl.program_id(0)
    last = pl.num_programs(0) - 1

    h = jnp.dot(x_ref[...], w1_ref[...],
                preferred_element_type=jnp.float32) + b1_ref[...]
    h = jnp.where(h >= 0, h, LEAKY_SLOPE * h)

    @pl.when(i == 0)
    def _():
        sum_ref[...] = jnp.zeros_like(sum_ref)
        sq_ref[...] = jnp.zeros_like(sq_ref)

    if ragged:
        # Only the ragged last tile needs the padding-row mask.
        @pl.when(i == last)
        def _():
            row = i * tile_n + lax.broadcasted_iota(jnp.int32, h.shape, 0)
            hm = jnp.where(row < n_rows, h, 0.0)
            sum_ref[...] += jnp.sum(hm, axis=0, keepdims=True)
            sq_ref[...] += jnp.sum(hm * hm, axis=0, keepdims=True)

        @pl.when(i != last)
        def _():
            sum_ref[...] += jnp.sum(h, axis=0, keepdims=True)
            sq_ref[...] += jnp.sum(h * h, axis=0, keepdims=True)
    else:
        sum_ref[...] += jnp.sum(h, axis=0, keepdims=True)
        sq_ref[...] += jnp.sum(h * h, axis=0, keepdims=True)

    # Finalize once so pass 2 does no per-tile statistics math.
    @pl.when(i == last)
    def _():
        inv_n = 1.0 / float(n_rows)
        mean = sum_ref[...] * inv_n
        # Single-pass E[h^2] - E[h]^2; clamp against tiny negative cancellation.
        var = jnp.maximum(sq_ref[...] * inv_n - mean * mean, 0.0)
        sum_ref[...] = mean
        sq_ref[...] = lax.rsqrt(var + EPS)


# ---------------------------------------------------------------------------
# Pass 2 (tiled path): recompute h from x (no stored intermediate), compute
# the fused gamma|beta style matmul, normalize, apply the affine.
# ---------------------------------------------------------------------------
def _pass2_kernel(x_ref, w_ref, w1_ref, b1_ref, w2_ref, b2_ref,
                  mean_ref, istd_ref, o_ref, *, out_pad):
    h = jnp.dot(x_ref[...], w1_ref[...],
                preferred_element_type=jnp.float32) + b1_ref[...]
    h = jnp.where(h >= 0, h, LEAKY_SLOPE * h)

    style = jnp.dot(w_ref[...], w2_ref[...],
                    preferred_element_type=jnp.float32) + b2_ref[...]
    gamma = style[:, :out_pad]
    beta = style[:, out_pad:]

    n = (h - mean_ref[...]) * istd_ref[...]
    o_ref[...] = (gamma * n + beta).astype(o_ref.dtype)


# ---------------------------------------------------------------------------
# Wrapper
# ---------------------------------------------------------------------------
def style_linear_layer(x, w, params, *, tile_n=512, fast_path_bytes=8 << 20):
    """x: [N, in_dim], w: [N, w_dim] -> [N, out_dim]."""
    N, in_dim = x.shape
    assert w.shape[0] == N
    w_dim = w.shape[1]
    out_dim = params["w1"].shape[1]

    out_pad = _round_up(out_dim, LANE)           # lane-dense feature dim
    pad_c = out_pad - out_dim

    f32 = jnp.float32
    x = x.astype(f32)
    w = w.astype(f32)

    # Tiny weight arrays: pad columns so every feature-dim op is full-lane.
    w1 = jnp.pad(params["w1"].astype(f32), ((0, 0), (0, pad_c)))
    b1 = jnp.pad(params["b1"].astype(f32).reshape(1, -1), ((0, 0), (0, pad_c)))
    w2 = params["w2"].astype(f32)                # [w_dim, 2*out_dim] = [g | b]
    b2 = params["b2"].astype(f32).reshape(1, -1)
    if pad_c:
        w2 = jnp.concatenate(
            [jnp.pad(w2[:, :out_dim], ((0, 0), (0, pad_c))),
             jnp.pad(w2[:, out_dim:], ((0, 0), (0, pad_c)))], axis=1)
        b2 = jnp.concatenate(
            [jnp.pad(b2[:, :out_dim], ((0, 0), (0, pad_c))),
             jnp.pad(b2[:, out_dim:], ((0, 0), (0, pad_c)))], axis=1)

    # ---- small-N fast path: single kernel, everything VMEM-resident ----
    est_bytes = 4 * (N * (in_dim + w_dim + 6 * out_pad)
                     + in_dim * out_pad + 3 * w_dim * out_pad + 3 * out_pad)
    if est_bytes <= fast_path_bytes:
        out = pl.pallas_call(
            functools.partial(_fused_kernel, n_rows=N, out_pad=out_pad),
            out_shape=jax.ShapeDtypeStruct((N, out_pad), f32),
        )(x, w, w1, b1, w2, b2)
        return out if pad_c == 0 else out[:, :out_dim]

    # ---- tiled two-pass path ----
    tile_n = max(8, min(_round_up(tile_n, 8), _round_up(N, 8)))
    n_tiles = pl.cdiv(N, tile_n)
    ragged = (N % tile_n) != 0

    # Pass 1: per-channel mean / inv_std (VMEM-resident accumulators).
    mean, istd = pl.pallas_call(
        functools.partial(_pass1_kernel, n_rows=N, tile_n=tile_n, ragged=ragged),
        grid=(n_tiles,),
        in_specs=[
            pl.BlockSpec((tile_n, in_dim), lambda i: (i, 0)),
            pl.BlockSpec((in_dim, out_pad), lambda i: (0, 0)),
            pl.BlockSpec((1, out_pad), lambda i: (0, 0)),
        ],
        out_specs=[
            pl.BlockSpec((1, out_pad), lambda i: (0, 0)),
            pl.BlockSpec((1, out_pad), lambda i: (0, 0)),
        ],
        out_shape=(
            jax.ShapeDtypeStruct((1, out_pad), f32),
            jax.ShapeDtypeStruct((1, out_pad), f32),
        ),
        compiler_params=pltpu.CompilerParams(
            dimension_semantics=("arbitrary",)),
    )(x, w1, b1)

    # Pass 2: recompute h, normalize, fused style affine ("parallel" so the
    # second TensorCore on v7x can take half the tiles).
    out = pl.pallas_call(
        functools.partial(_pass2_kernel, out_pad=out_pad),
        grid=(n_tiles,),
        in_specs=[
            pl.BlockSpec((tile_n, in_dim), lambda i: (i, 0)),
            pl.BlockSpec((tile_n, w_dim), lambda i: (i, 0)),
            pl.BlockSpec((in_dim, out_pad), lambda i: (0, 0)),
            pl.BlockSpec((1, out_pad), lambda i: (0, 0)),
            pl.BlockSpec((w_dim, 2 * out_pad), lambda i: (0, 0)),
            pl.BlockSpec((1, 2 * out_pad), lambda i: (0, 0)),
            pl.BlockSpec((1, out_pad), lambda i: (0, 0)),
            pl.BlockSpec((1, out_pad), lambda i: (0, 0)),
        ],
        out_specs=pl.BlockSpec((tile_n, out_pad), lambda i: (i, 0)),
        out_shape=jax.ShapeDtypeStruct((N, out_pad), f32),
        compiler_params=pltpu.CompilerParams(
            dimension_semantics=("parallel",)),
    )(x, w, w1, b1, w2, b2, mean, istd)

    return out if pad_c == 0 else out[:, :out_dim]


# ---------------------------------------------------------------------------
# Parameters / reference
# ---------------------------------------------------------------------------
def init_params(key, in_dim, w_dim, out_dim):
    k1, k2 = jax.random.split(key, 2)
    # nn.Linear(in_dim, out_dim): deterministic synthetic init (pre-transposed).
    w1 = (jax.random.normal(k1, (in_dim, out_dim), jnp.float32)
          / jnp.sqrt(jnp.float32(in_dim)))
    b1 = jnp.zeros((out_dim,), jnp.float32)
    # adain.affine = nn.Linear(w_dim, 2*out_dim): weight ~ N(0,1),
    # bias[:out_dim]=1 (gamma), bias[out_dim:]=0 (beta). Stored pre-transposed
    # and FUSED as [w_dim, 2*out_dim] so the kernel runs a single wide matmul.
    w2 = jax.random.normal(k2, (w_dim, 2 * out_dim), jnp.float32)
    b2 = jnp.concatenate([jnp.ones((out_dim,), jnp.float32),
                          jnp.zeros((out_dim,), jnp.float32)])
    return {"w1": w1, "b1": b1, "w2": w2, "b2": b2}


def reference(x, w, p):
    out_dim = p["w1"].shape[1]
    h = x @ p["w1"] + p["b1"]
    h = jnp.where(h >= 0, h, LEAKY_SLOPE * h)
    style = w @ p["w2"] + p["b2"]
    gamma, beta = style[:, :out_dim], style[:, out_dim:]
    mean = jnp.mean(h, axis=0, keepdims=True)
    var = jnp.mean((h - mean) ** 2, axis=0, keepdims=True)
    n = (h - mean) / jnp.sqrt(var + EPS)
    return gamma * n + beta


if __name__ == "__main__":
    key = jax.random.PRNGKey(0)
    in_dim, w_dim, out_dim = 32, 16, 128

    # --- small-N config: exercises the single-call fused fast path ---
    N = 200
    kx, kw, kp = jax.random.split(key, 3)
    x = jax.random.normal(kx, (N, in_dim), jnp.float32)
    w = jax.random.normal(kw, (N, w_dim), jnp.float32)
    params = init_params(kp, in_dim, w_dim, out_dim)

    out = jax.block_until_ready(style_linear_layer(x, w, params))
    ref = reference(x, w, params)
    assert out.shape == (N, out_dim)
    err = jnp.max(jnp.abs(out - ref))
    assert jnp.allclose(out, ref, atol=2e-3, rtol=2e-3), \
        f"fast-path mismatch, max err {err}"

    # --- larger ragged-N config: forces the tiled two-pass path ---
    N2 = 1300
    kx2, kw2 = jax.random.split(jax.random.PRNGKey(1), 2)
    x2 = jax.random.normal(kx2, (N2, in_dim), jnp.float32)
    s2 = jax.random.normal(kw2, (N2, w_dim), jnp.float32)

    out2 = jax.block_until_ready(
        style_linear_layer(x2, s2, params, tile_n=512, fast_path_bytes=0))
    ref2 = reference(x2, s2, params)
    assert out2.shape == (N2, out_dim)
    err2 = jnp.max(jnp.abs(out2 - ref2))
    assert jnp.allclose(out2, ref2, atol=2e-3, rtol=2e-3), \
        f"tiled-path mismatch, max err {err2}"

    print("KERNEL_OK")
</pallas_src>

<mosaic_0001>
module attributes {stable_mosaic.version = 11 : i64} {
  func.func @_fused_kernel(%arg0: memref<200x32xf32, #tpu.memory_space<vmem>>, %arg1: memref<200x16xf32, #tpu.memory_space<vmem>>, %arg2: memref<32x128xf32, #tpu.memory_space<vmem>>, %arg3: memref<1x128xf32, #tpu.memory_space<vmem>>, %arg4: memref<16x256xf32, #tpu.memory_space<vmem>>, %arg5: memref<1x256xf32, #tpu.memory_space<vmem>>, %arg6: memref<200x128xf32, #tpu.memory_space<vmem>>) attributes {dimension_semantics = [], scalar_prefetch = 0 : i64, scratch_operands = 0 : i64, tpu.core_type = #tpu.core_type<tc>} {
    %c0 = arith.constant 0 : index
    %c0_0 = arith.constant 0 : index
    %0 = vector.load %arg0[%c0, %c0_0] : memref<200x32xf32, #tpu.memory_space<vmem>>, vector<200x32xf32>
    %c0_1 = arith.constant 0 : index
    %c0_2 = arith.constant 0 : index
    %1 = vector.load %arg2[%c0_1, %c0_2] : memref<32x128xf32, #tpu.memory_space<vmem>>, vector<32x128xf32>
    %cst = arith.constant dense<0.000000e+00> : vector<200x128xf32>
    %2 = tpu.matmul %0, %1, %cst {dimension_numbers = #tpu.dot_dimension_numbers<[1], [0], [0], [1], [0, 0, 1, 1], [], []>} : vector<200x32xf32>, vector<32x128xf32>, vector<200x128xf32> -> vector<200x128xf32>
    %c0_3 = arith.constant 0 : index
    %c0_4 = arith.constant 0 : index
    %3 = vector.load %arg3[%c0_3, %c0_4] : memref<1x128xf32, #tpu.memory_space<vmem>>, vector<1x128xf32>
    %4 = vector.broadcast %3 : vector<1x128xf32> to vector<200x128xf32>
    %5 = arith.addf %2, %4 : vector<200x128xf32>
    %cst_5 = arith.constant 0.000000e+00 : f32
    %6 = vector.broadcast %cst_5 : f32 to vector<200x128xf32>
    %7 = arith.cmpf oge, %5, %6 : vector<200x128xf32>
    %cst_6 = arith.constant 0.00999999977 : f32
    %8 = vector.broadcast %cst_6 : f32 to vector<200x128xf32>
    %9 = arith.mulf %8, %5 : vector<200x128xf32>
    %10 = arith.select %7, %5, %9 : vector<200x128xi1>, vector<200x128xf32>
    %cst_7 = arith.constant dense<0.000000e+00> : vector<128xf32>
    %11 = vector.multi_reduction <add>, %10, %cst_7 [0] : vector<200x128xf32> to vector<128xf32>
    %12 = vector.shape_cast %11 : vector<128xf32> to vector<1x128xf32>
    %cst_8 = arith.constant 5.000000e-03 : f32
    %13 = vector.broadcast %cst_8 : f32 to vector<1x128xf32>
    %14 = arith.mulf %12, %13 : vector<1x128xf32>
    %15 = vector.broadcast %14 : vector<1x128xf32> to vector<200x128xf32>
    %16 = arith.subf %10, %15 : vector<200x128xf32>
    %17 = arith.mulf %16, %16 : vector<200x128xf32>
    %cst_9 = arith.constant dense<0.000000e+00> : vector<128xf32>
    %18 = vector.multi_reduction <add>, %17, %cst_9 [0] : vector<200x128xf32> to vector<128xf32>
    %19 = vector.shape_cast %18 : vector<128xf32> to vector<1x128xf32>
    %cst_10 = arith.constant 5.000000e-03 : f32
    %20 = vector.broadcast %cst_10 : f32 to vector<1x128xf32>
    %21 = arith.mulf %19, %20 : vector<1x128xf32>
    %cst_11 = arith.constant 9.99999974E-6 : f32
    %22 = vector.broadcast %cst_11 : f32 to vector<1x128xf32>
    %23 = arith.addf %21, %22 : vector<1x128xf32>
    %24 = math.rsqrt %23 : vector<1x128xf32>
    %c0_12 = arith.constant 0 : index
    %c0_13 = arith.constant 0 : index
    %25 = vector.load %arg1[%c0_12, %c0_13] : memref<200x16xf32, #tpu.memory_space<vmem>>, vector<200x16xf32>
    %c0_14 = arith.constant 0 : index
    %c0_15 = arith.constant 0 : index
    %26 = vector.load %arg4[%c0_14, %c0_15] : memref<16x256xf32, #tpu.memory_space<vmem>>, vector<16x256xf32>
    %cst_16 = arith.constant dense<0.000000e+00> : vector<200x256xf32>
    %27 = tpu.matmul %25, %26, %cst_16 {dimension_numbers = #tpu.dot_dimension_numbers<[1], [0], [0], [1], [0, 0, 1, 1], [], []>} : vector<200x16xf32>, vector<16x256xf32>, vector<200x256xf32> -> vector<200x256xf32>
    %c0_17 = arith.constant 0 : index
    %c0_18 = arith.constant 0 : index
    %28 = vector.load %arg5[%c0_17, %c0_18] : memref<1x256xf32, #tpu.memory_space<vmem>>, vector<1x256xf32>
    %29 = vector.broadcast %28 : vector<1x256xf32> to vector<200x256xf32>
    %30 = arith.addf %27, %29 : vector<200x256xf32>
    %31 = vector.extract_strided_slice %30 {offsets = [0, 0], sizes = [200, 128], strides = [1, 1]} : vector<200x256xf32> to vector<200x128xf32>
    %32 = vector.extract_strided_slice %30 {offsets = [0, 128], sizes = [200, 128], strides = [1, 1]} : vector<200x256xf32> to vector<200x128xf32>
    %33 = vector.broadcast %24 : vector<1x128xf32> to vector<200x128xf32>
    %34 = arith.mulf %16, %33 : vector<200x128xf32>
    %35 = arith.mulf %31, %34 : vector<200x128xf32>
    %36 = arith.addf %35, %32 : vector<200x128xf32>
    %c0_19 = arith.constant 0 : index
    %c0_20 = arith.constant 0 : index
    %37 = vector.load %arg6[%c0_19, %c0_20] : memref<200x128xf32, #tpu.memory_space<vmem>>, vector<200x128xf32>
    tpu.vector_store %arg6[%c0_19, %c0_20], %36 {strides = array<i32>} : memref<200x128xf32, #tpu.memory_space<vmem>>, vector<200x128xf32>,
    return
  }
}

</mosaic_0001>

<llo_original>
// kernel: tpu_custom_call.1
$region0: #{tpu_custom_call.1}
  #allocation0 [shape = 'u32[]', space=smem, size = 0x4, offset = 0x4, fixed_abs, tag = 'smem constant byte address 0x4 - core index']
  #allocation1 [shape = 'u32[144,128]{1,0:T(1,128)}', space=vmem, size = 0x12000, scoped, tag = 'internal scratch']
  %s0 = inlined_call_operand.vmem [shape: f32[200,32], index: 0, kind: input, shape index: {}]
  %s1 = inlined_call_operand.vmem [shape: f32[200,16], index: 1, kind: input, shape index: {}]
  %s2 = inlined_call_operand.vmem [shape: f32[32,128], index: 2, kind: input, shape index: {}]
  %s3 = inlined_call_operand.vmem [shape: f32[1,128], index: 3, kind: input, shape index: {}]
  %s4 = inlined_call_operand.vmem [shape: f32[16,256], index: 4, kind: input, shape index: {}]
  %s5 = inlined_call_operand.vmem [shape: f32[1,256], index: 5, kind: input, shape index: {}]
  %s6 = inlined_call_operand.hbm [shape: f32[200,128], index: 6, kind: output, shape index: {}]
  %s7 = sld [smem:[#allocation0]]
  $region34: #{tpu_custom_call.1} parent=0
    _
  %s9 = ssub.s32 1, %s7
  %s10 = scalar_select 0, %s9, %s7
  $region1: #{tpu_custom_call.1} parent=0
    #allocation2 [shape = 'u8[102400]{0}', space=vmem, size = 0x19000, scoped, tag = 'output window, operand 0, single buffered']
    #allocation3 [shape = 's32[1]{0}', space=sflag, size = 0x4, scoped, tag = 'scoped memory for tpu_custom_call.1']
    %11 = vsyncpa [#allocation3], 0
    // Predicated region
    $region2: #{tpu_custom_call.1} parent=1 // pred_check
      _
    $region3: #{tpu_custom_call.1} parent=1 // pred_check_branch
      %13 = sbr.rel (0) target = $region5
    $region4: #{tpu_custom_call.1} parent=1 // pred_region
      _
    $region5: #{tpu_custom_call.1} parent=1 // pred_fallthru
      _
    // Predicated region
    $region6: #{tpu_custom_call.1} parent=1 // pred_check
      _
    $region7: #{tpu_custom_call.1} parent=1 // pred_check_branch
      %15 = sbr.rel (0) target = $region9
    $region8: #{tpu_custom_call.1} parent=1 // pred_region
      _
    $region9: #{tpu_custom_call.1} parent=1 // pred_fallthru
      _
    // Predicated region
    $region10: #{tpu_custom_call.1} parent=1 // pred_check
      _
    $region11: #{tpu_custom_call.1} parent=1 // pred_check_branch
      %17 = sbr.rel (0) target = $region13
    $region12: #{tpu_custom_call.1} parent=1 // pred_region
      _
    $region13: #{tpu_custom_call.1} parent=1 // pred_fallthru
      _
    // Predicated region
    $region14: #{tpu_custom_call.1} parent=1 // pred_check
      _
    $region15: #{tpu_custom_call.1} parent=1 // pred_check_branch
      %19 = sbr.rel (0) target = $region17
    $region16: #{tpu_custom_call.1} parent=1 // pred_region
      _
    $region17: #{tpu_custom_call.1} parent=1 // pred_fallthru
      _
    // Predicated region
    $region18: #{tpu_custom_call.1} parent=1 // pred_check
      _
    $region19: #{tpu_custom_call.1} parent=1 // pred_check_branch
      %21 = sbr.rel (0) target = $region21
    $region20: #{tpu_custom_call.1} parent=1 // pred_region
      _
    $region21: #{tpu_custom_call.1} parent=1 // pred_fallthru
      _
    // Predicated region
    $region22: #{tpu_custom_call.1} parent=1 // pred_check
      _
    $region23: #{tpu_custom_call.1} parent=1 // pred_check_branch
      %23 = sbr.rel (0) target = $region25
    $region24: #{tpu_custom_call.1} parent=1 // pred_region
      _
    $region25: #{tpu_custom_call.1} parent=1 // pred_fallthru
      _
    %v24 = vld [vmem:[%s0] sm:$0xff]
    %v25 = vld [vmem:[%s0 + $0x8] sm:$0xff]
    %v26 = vld [vmem:[%s0 + $0x10] sm:$0xff]
    %v27 = vld [vmem:[%s0 + $0x18] sm:$0xff]
    %v28 = vld [vmem:[%s0 + $0x20] sm:$0xff]
    %v29 = vld [vmem:[%s0 + $0x28] sm:$0xff]
    %v30 = vld [vmem:[%s0 + $0x30] sm:$0xff]
    %v31 = vld [vmem:[%s0 + $0x38] sm:$0xff]
    %v32 = vld [vmem:[%s0 + $0x40] sm:$0xff]
    %v33 = vld [vmem:[%s0 + $0x48] sm:$0xff]
    %v34 = vld [vmem:[%s0 + $0x50] sm:$0xff]
    %v35 = vld [vmem:[%s0 + $0x58] sm:$0xff]
    %v36 = vld [vmem:[%s0 + $0x60] sm:$0xff]
    %v37 = vld [vmem:[%s0 + $0x68] sm:$0xff]
    %v38 = vld [vmem:[%s0 + $0x70] sm:$0xff]
    %v39 = vld [vmem:[%s0 + $0x78] sm:$0xff]
    %v40 = vld [vmem:[%s0 + $0x80] sm:$0xff]
    %v41 = vld [vmem:[%s0 + $0x88] sm:$0xff]
    %v42 = vld [vmem:[%s0 + $0x90] sm:$0xff]
    %v43 = vld [vmem:[%s0 + $0x98] sm:$0xff]
    %v44 = vld [vmem:[%s0 + $0xa0] sm:$0xff]
    %v45 = vld [vmem:[%s0 + $0xa8] sm:$0xff]
    %v46 = vld [vmem:[%s0 + $0xb0] sm:$0xff]
    %v47 = vld [vmem:[%s0 + $0xb8] sm:$0xff]
    %v48 = vld [vmem:[%s0 + $0xc0] sm:$0xff]
    %v49 = vld [vmem:[%s2] sm:$0xff]
    %v50 = vld [vmem:[%s2 + $0x8] sm:$0xff]
    %v51 = vld [vmem:[%s2 + $0x10] sm:$0xff]
    %v52 = vld [vmem:[%s2 + $0x18] sm:$0xff]
    %v53 = vld [vmem:[%s3] sm:$0x1]
    %v55 = vlaneseq
    %v56 = vshrl.u32 %v55, 7
    %v57 = vsub.s32 0, %v56
    %v58 = vrot.slane %v53, %v57
    %vm60 = vcmask 261120
    %v62 = vsel %vm60, %v24, 0
    %v65 = vsel %vm60, %v25, 0
    %v68 = vsel %vm60, %v26, 0
    %v71 = vsel %vm60, %v27, 0
    %v74 = vsel %vm60, %v28, 0
    %v77 = vsel %vm60, %v29, 0
    %v80 = vsel %vm60, %v30, 0
    %v83 = vsel %vm60, %v31, 0
    %v86 = vsel %vm60, %v32, 0
    %v89 = vsel %vm60, %v33, 0
    %v92 = vsel %vm60, %v34, 0
    %v95 = vsel %vm60, %v35, 0
    %v98 = vsel %vm60, %v36, 0
    %v101 = vsel %vm60, %v37, 0
    %v104 = vsel %vm60, %v38, 0
    %v107 = vsel %vm60, %v39, 0
    %v110 = vsel %vm60, %v40, 0
    %v113 = vsel %vm60, %v41, 0
    %v116 = vsel %vm60, %v42, 0
    %v119 = vsel %vm60, %v43, 0
    %v122 = vsel %vm60, %v44, 0
    %v125 = vsel %vm60, %v45, 0
    %v128 = vsel %vm60, %v46, 0
    %v131 = vsel %vm60, %v47, 0
    %v134 = vsel %vm60, %v48, 0
    %136 = vmatprep.subr.mxu0 0.0
    %137 = vmatpush1.msra.mxu0 %v49
    %138 = vmatprep.subr.mxu0 0.0
    %139 = vmatpush1.msra.mxu0 %v50
    %140 = vmatprep.subr.mxu0 0.0
    %141 = vmatpush1.msra.mxu0 %v51
    %142 = vmatprep.subr.mxu0 0.0
    %143 = vmatpush1.msra.mxu0 %v52
    %144 = vmatprep.subr.mxu0 0.0
    %145 = vmatpush1.msra.mxu0 0.0
    %146 = vmatprep.subr.mxu0 0.0
    %147 = vmatpush1.msra.mxu0 0.0
    %148 = vmatprep.subr.mxu0 0.0
    %149 = vmatpush1.msra.mxu0 0.0
    %150 = vmatprep.subr.mxu0 0.0
    %151 = vmatpush1.msra.mxu0 0.0
    %152 = vmatprep.subr.mxu0 0.0
    %153 = vmatpush1.msra.mxu0 0.0
    %154 = vmatprep.subr.mxu0 0.0
    %155 = vmatpush1.msra.mxu0 0.0
    %156 = vmatprep.subr.mxu0 0.0
    %157 = vmatpush1.msra.mxu0 0.0
    %158 = vmatprep.subr.mxu0 0.0
    %159 = vmatpush1.msra.mxu0 0.0
    %160 = vmatprep.subr.mxu0 0.0
    %161 = vmatpush1.msra.mxu0 0.0
    %162 = vmatprep.subr.mxu0 0.0
    %163 = vmatpush1.msra.mxu0 0.0
    %164 = vmatprep.subr.mxu0 0.0
    %165 = vmatpush1.msra.mxu0 0.0
    %166 = vmatprep.subr.mxu0 0.0
    %167 = vmatpush1.msra.mxu0 0.0
    %168 = vmatprep.subr.mxu0 0.0
    %169 = vmatpush1.msra.mxu0 0.0
    %170 = vmatprep.subr.mxu0 0.0
    %171 = vmatpush1.msra.mxu0 0.0
    %172 = vmatprep.subr.mxu0 0.0
    %173 = vmatpush1.msra.mxu0 0.0
    %174 = vmatprep.subr.mxu0 0.0
    %175 = vmatpush1.msra.mxu0 0.0
    %176 = vmatprep.subr.mxu0 0.0
    %177 = vmatpush1.msra.mxu0 0.0
    %178 = vmatprep.subr.mxu0 0.0
    %179 = vmatpush1.msra.mxu0 0.0
    %180 = vmatprep.subr.mxu0 0.0
    %181 = vmatpush1.msra.mxu0 0.0
    %182 = vmatprep.subr.mxu0 0.0
    %183 = vmatpush1.msra.mxu0 0.0
    %184 = vmatprep.subr.mxu0 0.0
    %185 = vmatpush1.msra.mxu0 0.0
    %186 = vmatprep.subr.mxu0 0.0
    %187 = vmatpush1.msra.mxu0 0.0
    %188 = vmatprep.subr.mxu0 0.0
    %189 = vmatpush1.msra.mxu0 0.0
    %190 = vmatprep.subr.mxu0 0.0
    %191 = vmatpush1.msra.mxu0 0.0
    %192 = vmatprep.subr.mxu0 0.0
    %193 = vmatpush1.msra.mxu0 0.0
    %194 = vmatprep.subr.mxu0 0.0
    %195 = vmatpush1.msra.mxu0 0.0
    %196 = vmatprep.subr.mxu0 0.0
    %197 = vmatpush1.msra.mxu0 0.0
    %198 = vmatprep.subr.mxu0 0.0
    %199 = vmatpush1.msra.mxu0 0.0
    %200 = vmatprep.mubr.f32.mxu0 0.0
    %201 = vmatmul.mubr.f32.gmra.mrb[0].mxu0 %v62
    %v202 = vpop.f32.mrb[0].mxu0
    %v203 = vadd.f32 %v58, %v202
    %v204 = vpop.f32.mrb[0].mxu0
    %205 = vmatprep.mubr.f32.mxu0 0.0
    %206 = vmatmul.mubr.f32.gmra.mrb[0].mxu0 %v65
    %v207 = vpop.f32.mrb[0].mxu0
    %v208 = vadd.f32 %v58, %v207
    %v209 = vpop.f32.mrb[0].mxu0
    %210 = vmatprep.mubr.f32.mxu0 0.0
    %211 = vmatmul.mubr.f32.gmra.mrb[0].mxu0 %v68
    %v212 = vpop.f32.mrb[0].mxu0
    %v213 = vadd.f32 %v58, %v212
    %v214 = vpop.f32.mrb[0].mxu0
    %215 = vmatprep.mubr.f32.mxu0 0.0
    %216 = vmatmul.mubr.f32.gmra.mrb[0].mxu0 %v71
    %v217 = vpop.f32.mrb[0].mxu0
    %v218 = vadd.f32 %v58, %v217
    %v219 = vpop.f32.mrb[0].mxu0
    %220 = vmatprep.mubr.f32.mxu0 0.0
    %221 = vmatmul.mubr.f32.gmra.mrb[0].mxu0 %v74
    %v222 = vpop.f32.mrb[0].mxu0
    %v223 = vadd.f32 %v58, %v222
    %v224 = vpop.f32.mrb[0].mxu0
    %225 = vmatprep.mubr.f32.mxu0 0.0
    %226 = vmatmul.mubr.f32.gmra.mrb[0].mxu0 %v77
    %v227 = vpop.f32.mrb[0].mxu0
    %v228 = vadd.f32 %v58, %v227
    %v229 = vpop.f32.mrb[0].mxu0
    %230 = vmatprep.mubr.f32.mxu0 0.0
    %231 = vmatmul.mubr.f32.gmra.mrb[0].mxu0 %v80
    %v232 = vpop.f32.mrb[0].mxu0
    %v233 = vadd.f32 %v58, %v232
    %v234 = vpop.f32.mrb[0].mxu0
    %235 = vmatprep.mubr.f32.mxu0 0.0
    %236 = vmatmul.mubr.f32.gmra.mrb[0].mxu0 %v83
    %v237 = vpop.f32.mrb[0].mxu0
    %v238 = vadd.f32 %v58, %v237
    %v239 = vpop.f32.mrb[0].mxu0
    %240 = vmatprep.mubr.f32.mxu0 0.0
    %241 = vmatmul.mubr.f32.gmra.mrb[0].mxu0 %v86
    %v242 = vpop.f32.mrb[0].mxu0
    %v243 = vadd.f32 %v58, %v242
    %v244 = vpop.f32.mrb[0].mxu0
    %245 = vmatprep.mubr.f32.mxu0 0.0
    %246 = vmatmul.mubr.f32.gmra.mrb[0].mxu0 %v89
    %v247 = vpop.f32.mrb[0].mxu0
    %v248 = vadd.f32 %v58, %v247
    %v249 = vpop.f32.mrb[0].mxu0
    %250 = vmatprep.mubr.f32.mxu0 0.0
    %251 = vmatmul.mubr.f32.gmra.mrb[0].mxu0 %v92
    %v252 = vpop.f32.mrb[0].mxu0
    %v253 = vadd.f32 %v58, %v252
    %v254 = vpop.f32.mrb[0].mxu0
    %255 = vmatprep.mubr.f32.mxu0 0.0
    %256 = vmatmul.mubr.f32.gmra.mrb[0].mxu0 %v95
    %v257 = vpop.f32.mrb[0].mxu0
    %v258 = vadd.f32 %v58, %v257
    %v259 = vpop.f32.mrb[0].mxu0
    %260 = vmatprep.mubr.f32.mxu0 0.0
    %261 = vmatmul.mubr.f32.gmra.mrb[0].mxu0 %v98
    %v262 = vpop.f32.mrb[0].mxu0
    %v263 = vadd.f32 %v58, %v262
    %v264 = vpop.f32.mrb[0].mxu0
    %265 = vmatprep.mubr.f32.mxu0 0.0
    %266 = vmatmul.mubr.f32.gmra.mrb[0].mxu0 %v101
    %v267 = vpop.f32.mrb[0].mxu0
    %v268 = vadd.f32 %v58, %v267
    %v269 = vpop.f32.mrb[0].mxu0
    %270 = vmatprep.mubr.f32.mxu0 0.0
    %271 = vmatmul.mubr.f32.gmra.mrb[0].mxu0 %v104
    %v272 = vpop.f32.mrb[0].mxu0
    %v273 = vadd.f32 %v58, %v272
    %v274 = vpop.f32.mrb[0].mxu0
    %275 = vmatprep.mubr.f32.mxu0 0.0
    %276 = vmatmul.mubr.f32.gmra.mrb[0].mxu0 %v107
    %v277 = vpop.f32.mrb[0].mxu0
    %v278 = vadd.f32 %v58, %v277
    %v279 = vpop.f32.mrb[0].mxu0
    %280 = vmatprep.mubr.f32.mxu0 0.0
    %281 = vmatmul.mubr.f32.gmra.mrb[0].mxu0 %v110
    %v282 = vpop.f32.mrb[0].mxu0
    %v283 = vadd.f32 %v58, %v282
    %v284 = vpop.f32.mrb[0].mxu0
    %285 = vmatprep.mubr.f32.mxu0 0.0
    %286 = vmatmul.mubr.f32.gmra.mrb[0].mxu0 %v113
    %v287 = vpop.f32.mrb[0].mxu0
    %v288 = vadd.f32 %v58, %v287
    %v289 = vpop.f32.mrb[0].mxu0
    %290 = vmatprep.mubr.f32.mxu0 0.0
    %291 = vmatmul.mubr.f32.gmra.mrb[0].mxu0 %v116
    %v292 = vpop.f32.mrb[0].mxu0
    %v293 = vadd.f32 %v58, %v292
    %v294 = vpop.f32.mrb[0].mxu0
    %295 = vmatprep.mubr.f32.mxu0 0.0
    %296 = vmatmul.mubr.f32.gmra.mrb[0].mxu0 %v119
    %v297 = vpop.f32.mrb[0].mxu0
    %v298 = vadd.f32 %v58, %v297
    %v299 = vpop.f32.mrb[0].mxu0
    %300 = vmatprep.mubr.f32.mxu0 0.0
    %301 = vmatmul.mubr.f32.gmra.mrb[0].mxu0 %v122
    %v302 = vpop.f32.mrb[0].mxu0
    %v303 = vadd.f32 %v58, %v302
    %v304 = vpop.f32.mrb[0].mxu0
    %305 = vmatprep.mubr.f32.mxu0 0.0
    %306 = vmatmul.mubr.f32.gmra.mrb[0].mxu0 %v125
    %v307 = vpop.f32.mrb[0].mxu0
    %v308 = vadd.f32 %v58, %v307
    %v309 = vpop.f32.mrb[0].mxu0
    %310 = vmatprep.mubr.f32.mxu0 0.0
    %311 = vmatmul.mubr.f32.gmra.mrb[0].mxu0 %v128
    %v312 = vpop.f32.mrb[0].mxu0
    %v313 = vadd.f32 %v58, %v312
    %v314 = vpop.f32.mrb[0].mxu0
    %315 = vmatprep.mubr.f32.mxu0 0.0
    %316 = vmatmul.mubr.f32.gmra.mrb[0].mxu0 %v131
    %v317 = vpop.f32.mrb[0].mxu0
    %v318 = vadd.f32 %v58, %v317
    %v319 = vpop.f32.mrb[0].mxu0
    %320 = vmatprep.mubr.f32.mxu0 0.0
    %321 = vmatmul.mubr.f32.gmra.mrb[0].mxu0 %v134
    %v322 = vpop.f32.mrb[0].mxu0
    %v323 = vadd.f32 %v58, %v322
    %v324 = vpop.f32.mrb[0].mxu0
    %325 = vdwg.mxu0
    %vm326 = vcmp.ge.f32.partialorder %v203, 0.0
    %vm327 = vcmp.ge.f32.partialorder %v208, 0.0
    %vm328 = vcmp.ge.f32.partialorder %v213, 0.0
    %vm329 = vcmp.ge.f32.partialorder %v218, 0.0
    %vm330 = vcmp.ge.f32.partialorder %v223, 0.0
    %vm331 = vcmp.ge.f32.partialorder %v228, 0.0
    %vm332 = vcmp.ge.f32.partialorder %v233, 0.0
    %vm333 = vcmp.ge.f32.partialorder %v238, 0.0
    %vm334 = vcmp.ge.f32.partialorder %v243, 0.0
    %vm335 = vcmp.ge.f32.partialorder %v248, 0.0
    %vm336 = vcmp.ge.f32.partialorder %v253, 0.0
    %vm337 = vcmp.ge.f32.partialorder %v258, 0.0
    %vm338 = vcmp.ge.f32.partialorder %v263, 0.0
    %vm339 = vcmp.ge.f32.partialorder %v268, 0.0
    %vm340 = vcmp.ge.f32.partialorder %v273, 0.0
    %vm341 = vcmp.ge.f32.partialorder %v278, 0.0
    %vm342 = vcmp.ge.f32.partialorder %v283, 0.0
    %vm343 = vcmp.ge.f32.partialorder %v288, 0.0
    %vm344 = vcmp.ge.f32.partialorder %v293, 0.0
    %vm345 = vcmp.ge.f32.partialorder %v298, 0.0
    %vm346 = vcmp.ge.f32.partialorder %v303, 0.0
    %vm347 = vcmp.ge.f32.partialorder %v308, 0.0
    %vm348 = vcmp.ge.f32.partialorder %v313, 0.0
    %vm349 = vcmp.ge.f32.partialorder %v318, 0.0
    %vm350 = vcmp.ge.f32.partialorder %v323, 0.0
    %v351 = vmul.f32 %v203, 0.01
    %v352 = vmul.f32 %v208, 0.01
    %v353 = vmul.f32 %v213, 0.01
    %v354 = vmul.f32 %v218, 0.01
    %v355 = vmul.f32 %v223, 0.01
    %v356 = vmul.f32 %v228, 0.01
    %v357 = vmul.f32 %v233, 0.01
    %v358 = vmul.f32 %v238, 0.01
    %v359 = vmul.f32 %v243, 0.01
    %v360 = vmul.f32 %v248, 0.01
    %v361 = vmul.f32 %v253, 0.01
    %v362 = vmul.f32 %v258, 0.01
    %v363 = vmul.f32 %v263, 0.01
    %v364 = vmul.f32 %v268, 0.01
    %v365 = vmul.f32 %v273, 0.01
    %v366 = vmul.f32 %v278, 0.01
    %v367 = vmul.f32 %v283, 0.01
    %v368 = vmul.f32 %v288, 0.01
    %v369 = vmul.f32 %v293, 0.01
    %v370 = vmul.f32 %v298, 0.01
    %v371 = vmul.f32 %v303, 0.01
    %v372 = vmul.f32 %v308, 0.01
    %v373 = vmul.f32 %v313, 0.01
    %v374 = vmul.f32 %v318, 0.01
    %v375 = vmul.f32 %v323, 0.01
    %v376 = vsel %vm326, %v203, %v351
    %v377 = vsel %vm327, %v208, %v352
    %v378 = vsel %vm328, %v213, %v353
    %v379 = vsel %vm329, %v218, %v354
    %v380 = vsel %vm330, %v223, %v355
    %v381 = vsel %vm331, %v228, %v356
    %v382 = vsel %vm332, %v233, %v357
    %v383 = vsel %vm333, %v238, %v358
    %v384 = vsel %vm334, %v243, %v359
    %v385 = vsel %vm335, %v248, %v360
    %v386 = vsel %vm336, %v253, %v361
    %v387 = vsel %vm337, %v258, %v362
    %v388 = vsel %vm338, %v263, %v363
    %v389 = vsel %vm339, %v268, %v364
    %v390 = vsel %vm340, %v273, %v365
    %v391 = vsel %vm341, %v278, %v366
    %v392 = vsel %vm342, %v283, %v367
    %v393 = vsel %vm343, %v288, %v368
    %v394 = vsel %vm344, %v293, %v369
    %v395 = vsel %vm345, %v298, %v370
    %v396 = vsel %vm346, %v303, %v371
    %v397 = vsel %vm347, %v308, %v372
    %v398 = vsel %vm348, %v313, %v373
    %v399 = vsel %vm349, %v318, %v374
    %v400 = vsel %vm350, %v323, %v375
    %v401 = vadd.f32 %v376, %v377
    %v402 = vadd.f32 %v401, %v378
    %v403 = vadd.f32 %v402, %v379
    %v404 = vadd.f32 %v403, %v380
    %v405 = vadd.f32 %v404, %v381
    %v406 = vadd.f32 %v405, %v382
    %v407 = vadd.f32 %v406, %v383
    %v408 = vadd.f32 %v407, %v384
    %v409 = vadd.f32 %v408, %v385
    %v410 = vadd.f32 %v409, %v386
    %v411 = vadd.f32 %v410, %v387
    %v412 = vadd.f32 %v411, %v388
    %v413 = vadd.f32 %v412, %v389
    %v414 = vadd.f32 %v413, %v390
    %v415 = vadd.f32 %v414, %v391
    %v416 = vadd.f32 %v415, %v392
    %v417 = vadd.f32 %v416, %v393
    %v418 = vadd.f32 %v417, %v394
    %v419 = vadd.f32 %v418, %v395
    %v420 = vadd.f32 %v419, %v396
    %v421 = vadd.f32 %v420, %v397
    %v422 = vadd.f32 %v421, %v398
    %v423 = vadd.f32 %v422, %v399
    %v424 = vadd.f32 %v423, %v400
    %v425 = vrot.slane %v424, 4
    %v426 = vadd.f32 %v424, %v425
    %v427 = vrot.slane %v426, 2
    %v428 = vadd.f32 %v426, %v427
    %v429 = vrot.slane %v428, 1
    %v430 = vadd.f32 %v428, %v429
    %v431 = vmul.f32 %v430, 0.005
    %v432 = vsub.f32 %v376, %v431
    %v433 = vsub.f32 %v377, %v431
    %v434 = vsub.f32 %v378, %v431
    %v435 = vsub.f32 %v379, %v431
    %v436 = vsub.f32 %v380, %v431
    %v437 = vsub.f32 %v381, %v431
    %v438 = vsub.f32 %v382, %v431
    %v439 = vsub.f32 %v383, %v431
    %v440 = vsub.f32 %v384, %v431
    %v441 = vsub.f32 %v385, %v431
    %v442 = vsub.f32 %v386, %v431
    %v443 = vsub.f32 %v387, %v431
    %v444 = vsub.f32 %v388, %v431
    %v445 = vsub.f32 %v389, %v431
    %v446 = vsub.f32 %v390, %v431
    %v447 = vsub.f32 %v391, %v431
    %v448 = vsub.f32 %v392, %v431
    %v449 = vsub.f32 %v393, %v431
    %v450 = vsub.f32 %v394, %v431
    %v451 = vsub.f32 %v395, %v431
    %v452 = vsub.f32 %v396, %v431
    %v453 = vsub.f32 %v397, %v431
    %v454 = vsub.f32 %v398, %v431
    %v455 = vsub.f32 %v399, %v431
    %v456 = vsub.f32 %v400, %v431
    %v457 = vmul.f32 %v432, %v432
    %v458 = vmul.f32 %v433, %v433
    %v459 = vmul.f32 %v434, %v434
    %v460 = vmul.f32 %v435, %v435
    %v461 = vmul.f32 %v436, %v436
    %v462 = vmul.f32 %v437, %v437
    %v463 = vmul.f32 %v438, %v438
    %v464 = vmul.f32 %v439, %v439
    %v465 = vmul.f32 %v440, %v440
    %v466 = vmul.f32 %v441, %v441
    %v467 = vmul.f32 %v442, %v442
    %v468 = vmul.f32 %v443, %v443
    %v469 = vmul.f32 %v444, %v444
    %v470 = vmul.f32 %v445, %v445
    %v471 = vmul.f32 %v446, %v446
    %v472 = vmul.f32 %v447, %v447
    %v473 = vmul.f32 %v448, %v448
    %v474 = vmul.f32 %v449, %v449
    %v475 = vmul.f32 %v450, %v450
    %v476 = vmul.f32 %v451, %v451
    %v477 = vmul.f32 %v452, %v452
    %v478 = vmul.f32 %v453, %v453
    %v479 = vmul.f32 %v454, %v454
    %v480 = vmul.f32 %v455, %v455
    %v481 = vmul.f32 %v456, %v456
    %v482 = vadd.f32 %v457, %v458
    %v483 = vadd.f32 %v482, %v459
    %v484 = vadd.f32 %v483, %v460
    %v485 = vadd.f32 %v484, %v461
    %v486 = vadd.f32 %v485, %v462
    %v487 = vadd.f32 %v486, %v463
    %v488 = vadd.f32 %v487, %v464
    %v489 = vadd.f32 %v488, %v465
    %v490 = vadd.f32 %v489, %v466
    %v491 = vadd.f32 %v490, %v467
    %v492 = vadd.f32 %v491, %v468
    %v493 = vadd.f32 %v492, %v469
    %v494 = vadd.f32 %v493, %v470
    %v495 = vadd.f32 %v494, %v471
    %v496 = vadd.f32 %v495, %v472
    %v497 = vadd.f32 %v496, %v473
    %v498 = vadd.f32 %v497, %v474
    %v499 = vadd.f32 %v498, %v475
    %v500 = vadd.f32 %v499, %v476
    %v501 = vadd.f32 %v500, %v477
    %v502 = vadd.f32 %v501, %v478
    %v503 = vadd.f32 %v502, %v479
    %v504 = vadd.f32 %v503, %v480
    %v505 = vadd.f32 %v504, %v481
    %v506 = vrot.slane %v505, 4
    %v507 = vadd.f32 %v505, %v506
    %v508 = vrot.slane %v507, 2
    %v509 = vadd.f32 %v507, %v508
    %v510 = vrot.slane %v509, 1
    %v511 = vadd.f32 %v509, %v510
    %v512 = vmul.f32 %v511, 0.005
    %v513 = vadd.f32 %v512, 1e-05
    %v514 = vrsqrt.pop %v513
    %v515 = vld [vmem:[%s1] sm:$0xff]
    %v516 = vld [vmem:[%s1 + $0x8] sm:$0xff]
    %v517 = vld [vmem:[%s1 + $0x10] sm:$0xff]
    %v518 = vld [vmem:[%s1 + $0x18] sm:$0xff]
    %v519 = vld [vmem:[%s1 + $0x20] sm:$0xff]
    %v520 = vld [vmem:[%s1 + $0x28] sm:$0xff]
    %v521 = vld [vmem:[%s1 + $0x30] sm:$0xff]
    %v522 = vld [vmem:[%s1 + $0x38] sm:$0xff]
    %v523 = vld [vmem:[%s1 + $0x40] sm:$0xff]
    %v524 = vld [vmem:[%s1 + $0x48] sm:$0xff]
    %v525 = vld [vmem:[%s1 + $0x50] sm:$0xff]
    %v526 = vld [vmem:[%s1 + $0x58] sm:$0xff]
    %v527 = vld [vmem:[%s1 + $0x60] sm:$0xff]
    %v528 = vld [vmem:[%s1 + $0x68] sm:$0xff]
    %v529 = vld [vmem:[%s1 + $0x70] sm:$0xff]
    %v530 = vld [vmem:[%s1 + $0x78] sm:$0xff]
    %v531 = vld [vmem:[%s1 + $0x80] sm:$0xff]
    %v532 = vld [vmem:[%s1 + $0x88] sm:$0xff]
    %v533 = vld [vmem:[%s1 + $0x90] sm:$0xff]
    %v534 = vld [vmem:[%s1 + $0x98] sm:$0xff]
    %v535 = vld [vmem:[%s1 + $0xa0] sm:$0xff]
    %v536 = vld [vmem:[%s1 + $0xa8] sm:$0xff]
    %v537 = vld [vmem:[%s1 + $0xb0] sm:$0xff]
    %v538 = vld [vmem:[%s1 + $0xb8] sm:$0xff]
    %v539 = vld [vmem:[%s1 + $0xc0] sm:$0xff]
    %v540 = vld [vmem:[%s4] sm:$0xff]
    %v541 = vld [vmem:[%s4 + $0x8] sm:$0xff]
    %v542 = vld [vmem:[%s4 + $0x10] sm:$0xff]
    %v543 = vld [vmem:[%s4 + $0x18] sm:$0xff]
    %v544 = vld [vmem:[%s5] sm:$0x3]
    %v546 = vlaneseq
    %v547 = vshrl.u32 %v546, 7
    %v548 = vsub.s32 0, %v547
    %v549 = vrot.slane %v544, %v548
    %v550 = vlaneseq
    %v551 = vshrl.u32 %v550, 7
    %v552 = vsub.s32 1, %v551
    %v553 = vrot.slane %v544, %v552
    %vm556 = vcmask 130048
    %v558 = vsel %vm556, %v515, 0
    %v561 = vsel %vm556, %v516, 0
    %v564 = vsel %vm556, %v517, 0
    %v567 = vsel %vm556, %v518, 0
    %v570 = vsel %vm556, %v519, 0
    %v573 = vsel %vm556, %v520, 0
    %v576 = vsel %vm556, %v521, 0
    %v579 = vsel %vm556, %v522, 0
    %v582 = vsel %vm556, %v523, 0
    %v585 = vsel %vm556, %v524, 0
    %v588 = vsel %vm556, %v525, 0
    %v591 = vsel %vm556, %v526, 0
    %v594 = vsel %vm556, %v527, 0
    %v597 = vsel %vm556, %v528, 0
    %v600 = vsel %vm556, %v529, 0
    %v603 = vsel %vm556, %v530, 0
    %v606 = vsel %vm556, %v531, 0
    %v609 = vsel %vm556, %v532, 0
    %v612 = vsel %vm556, %v533, 0
    %v615 = vsel %vm556, %v534, 0
    %v618 = vsel %vm556, %v535, 0
    %v621 = vsel %vm556, %v536, 0
    %v624 = vsel %vm556, %v537, 0
    %v627 = vsel %vm556, %v538, 0
    %v630 = vsel %vm556, %v539, 0
    %632 = vmatprep.subr.mxu0 %v541
    %633 = vmatpush1.msra.mxu0 %v540
    %634 = vmatprep.subr.mxu0 %v543
    %635 = vmatpush1.msra.mxu0 %v542
    %636 = vmatprep.subr.mxu0 0.0
    %637 = vmatpush1.msra.mxu0 0.0
    %638 = vmatprep.subr.mxu0 0.0
    %639 = vmatpush1.msra.mxu0 0.0
    %640 = vmatprep.subr.mxu0 0.0
    %641 = vmatpush1.msra.mxu0 0.0
    %642 = vmatprep.subr.mxu0 0.0
    %643 = vmatpush1.msra.mxu0 0.0
    %644 = vmatprep.subr.mxu0 0.0
    %645 = vmatpush1.msra.mxu0 0.0
    %646 = vmatprep.subr.mxu0 0.0
    %647 = vmatpush1.msra.mxu0 0.0
    %648 = vmatprep.subr.mxu0 0.0
    %649 = vmatpush1.msra.mxu0 0.0
    %650 = vmatprep.subr.mxu0 0.0
    %651 = vmatpush1.msra.mxu0 0.0
    %652 = vmatprep.subr.mxu0 0.0
    %653 = vmatpush1.msra.mxu0 0.0
    %654 = vmatprep.subr.mxu0 0.0
    %655 = vmatpush1.msra.mxu0 0.0
    %656 = vmatprep.subr.mxu0 0.0
    %657 = vmatpush1.msra.mxu0 0.0
    %658 = vmatprep.subr.mxu0 0.0
    %659 = vmatpush1.msra.mxu0 0.0
    %660 = vmatprep.subr.mxu0 0.0
    %661 = vmatpush1.msra.mxu0 0.0
    %662 = vmatprep.subr.mxu0 0.0
    %663 = vmatpush1.msra.mxu0 0.0
    %664 = vmatprep.subr.mxu0 0.0
    %665 = vmatpush1.msra.mxu0 0.0
    %666 = vmatprep.subr.mxu0 0.0
    %667 = vmatpush1.msra.mxu0 0.0
    %668 = vmatprep.subr.mxu0 0.0
    %669 = vmatpush1.msra.mxu0 0.0
    %670 = vmatprep.subr.mxu0 0.0
    %671 = vmatpush1.msra.mxu0 0.0
    %672 = vmatprep.subr.mxu0 0.0
    %673 = vmatpush1.msra.mxu0 0.0
    %674 = vmatprep.subr.mxu0 0.0
    %675 = vmatpush1.msra.mxu0 0.0
    %676 = vmatprep.subr.mxu0 0.0
    %677 = vmatpush1.msra.mxu0 0.0
    %678 = vmatprep.subr.mxu0 0.0
    %679 = vmatpush1.msra.mxu0 0.0
    %680 = vmatprep.subr.mxu0 0.0
    %681 = vmatpush1.msra.mxu0 0.0
    %682 = vmatprep.subr.mxu0 0.0
    %683 = vmatpush1.msra.mxu0 0.0
    %684 = vmatprep.subr.mxu0 0.0
    %685 = vmatpush1.msra.mxu0 0.0
    %686 = vmatprep.subr.mxu0 0.0
    %687 = vmatpush1.msra.mxu0 0.0
    %688 = vmatprep.subr.mxu0 0.0
    %689 = vmatpush1.msra.mxu0 0.0
    %690 = vmatprep.subr.mxu0 0.0
    %691 = vmatpush1.msra.mxu0 0.0
    %692 = vmatprep.subr.mxu0 0.0
    %693 = vmatpush1.msra.mxu0 0.0
    %694 = vmatprep.subr.mxu0 0.0
    %695 = vmatpush1.msra.mxu0 0.0
    %696 = vmatprep.mubr.f32.mxu0 0.0
    %697 = vmatmul.mubr.f32.gmra.mrb[0].mxu0 %v558
    %v698 = vpop.f32.mrb[0].mxu0
    %v699 = vadd.f32 %v549, %v698
    %v700 = vpop.f32.mrb[0].mxu0
    %v701 = vadd.f32 %v553, %v700
    %702 = vmatprep.mubr.f32.mxu0 0.0
    %703 = vmatmul.mubr.f32.gmra.mrb[0].mxu0 %v561
    %v704 = vpop.f32.mrb[0].mxu0
    %v705 = vadd.f32 %v549, %v704
    %v706 = vpop.f32.mrb[0].mxu0
    %v707 = vadd.f32 %v553, %v706
    %708 = vmatprep.mubr.f32.mxu0 0.0
    %709 = vmatmul.mubr.f32.gmra.mrb[0].mxu0 %v564
    %v710 = vpop.f32.mrb[0].mxu0
    %v711 = vadd.f32 %v549, %v710
    %v712 = vpop.f32.mrb[0].mxu0
    %v713 = vadd.f32 %v553, %v712
    %714 = vmatprep.mubr.f32.mxu0 0.0
    %715 = vmatmul.mubr.f32.gmra.mrb[0].mxu0 %v567
    %v716 = vpop.f32.mrb[0].mxu0
    %v717 = vadd.f32 %v549, %v716
    %v718 = vpop.f32.mrb[0].mxu0
    %v719 = vadd.f32 %v553, %v718
    %720 = vmatprep.mubr.f32.mxu0 0.0
    %721 = vmatmul.mubr.f32.gmra.mrb[0].mxu0 %v570
    %v722 = vpop.f32.mrb[0].mxu0
    %v723 = vadd.f32 %v549, %v722
    %v724 = vpop.f32.mrb[0].mxu0
    %v725 = vadd.f32 %v553, %v724
    %726 = vmatprep.mubr.f32.mxu0 0.0
    %727 = vmatmul.mubr.f32.gmra.mrb[0].mxu0 %v573
    %v728 = vpop.f32.mrb[0].mxu0
    %v729 = vadd.f32 %v549, %v728
    %v730 = vpop.f32.mrb[0].mxu0
    %v731 = vadd.f32 %v553, %v730
    %732 = vmatprep.mubr.f32.mxu0 0.0
    %733 = vmatmul.mubr.f32.gmra.mrb[0].mxu0 %v576
    %v734 = vpop.f32.mrb[0].mxu0
    %v735 = vadd.f32 %v549, %v734
    %v736 = vpop.f32.mrb[0].mxu0
    %v737 = vadd.f32 %v553, %v736
    %738 = vmatprep.mubr.f32.mxu0 0.0
    %739 = vmatmul.mubr.f32.gmra.mrb[0].mxu0 %v579
    %v740 = vpop.f32.mrb[0].mxu0
    %v741 = vadd.f32 %v549, %v740
    %v742 = vpop.f32.mrb[0].mxu0
    %v743 = vadd.f32 %v553, %v742
    %744 = vmatprep.mubr.f32.mxu0 0.0
    %745 = vmatmul.mubr.f32.gmra.mrb[0].mxu0 %v582
    %v746 = vpop.f32.mrb[0].mxu0
    %v747 = vadd.f32 %v549, %v746
    %v748 = vpop.f32.mrb[0].mxu0
    %v749 = vadd.f32 %v553, %v748
    %750 = vmatprep.mubr.f32.mxu0 0.0
    %751 = vmatmul.mubr.f32.gmra.mrb[0].mxu0 %v585
    %v752 = vpop.f32.mrb[0].mxu0
    %v753 = vadd.f32 %v549, %v752
    %v754 = vpop.f32.mrb[0].mxu0
    %v755 = vadd.f32 %v553, %v754
    %756 = vmatprep.mubr.f32.mxu0 0.0
    %757 = vmatmul.mubr.f32.gmra.mrb[0].mxu0 %v588
    %v758 = vpop.f32.mrb[0].mxu0
    %v759 = vadd.f32 %v549, %v758
    %v760 = vpop.f32.mrb[0].mxu0
    %v761 = vadd.f32 %v553, %v760
    %762 = vmatprep.mubr.f32.mxu0 0.0
    %763 = vmatmul.mubr.f32.gmra.mrb[0].mxu0 %v591
    %v764 = vpop.f32.mrb[0].mxu0
    %v765 = vadd.f32 %v549, %v764
    %v766 = vpop.f32.mrb[0].mxu0
    %v767 = vadd.f32 %v553, %v766
    %768 = vmatprep.mubr.f32.mxu0 0.0
    %769 = vmatmul.mubr.f32.gmra.mrb[0].mxu0 %v594
    %v770 = vpop.f32.mrb[0].mxu0
    %v771 = vadd.f32 %v549, %v770
    %v772 = vpop.f32.mrb[0].mxu0
    %v773 = vadd.f32 %v553, %v772
    %774 = vmatprep.mubr.f32.mxu0 0.0
    %775 = vmatmul.mubr.f32.gmra.mrb[0].mxu0 %v597
    %v776 = vpop.f32.mrb[0].mxu0
    %v777 = vadd.f32 %v549, %v776
    %v778 = vpop.f32.mrb[0].mxu0
    %v779 = vadd.f32 %v553, %v778
    %780 = vmatprep.mubr.f32.mxu0 0.0
    %781 = vmatmul.mubr.f32.gmra.mrb[0].mxu0 %v600
    %v782 = vpop.f32.mrb[0].mxu0
    %v783 = vadd.f32 %v549, %v782
    %v784 = vpop.f32.mrb[0].mxu0
    %v785 = vadd.f32 %v553, %v784
    %786 = vmatprep.mubr.f32.mxu0 0.0
    %787 = vmatmul.mubr.f32.gmra.mrb[0].mxu0 %v603
    %v788 = vpop.f32.mrb[0].mxu0
    %v789 = vadd.f32 %v549, %v788
    %v790 = vpop.f32.mrb[0].mxu0
    %v791 = vadd.f32 %v553, %v790
    %792 = vmatprep.mubr.f32.mxu0 0.0
    %793 = vmatmul.mubr.f32.gmra.mrb[0].mxu0 %v606
    %v794 = vpop.f32.mrb[0].mxu0
    %v795 = vadd.f32 %v549, %v794
    %v796 = vpop.f32.mrb[0].mxu0
    %v797 = vadd.f32 %v553, %v796
    %798 = vmatprep.mubr.f32.mxu0 0.0
    %799 = vmatmul.mubr.f32.gmra.mrb[0].mxu0 %v609
    %v800 = vpop.f32.mrb[0].mxu0
    %v801 = vadd.f32 %v549, %v800
    %v802 = vpop.f32.mrb[0].mxu0
    %v803 = vadd.f32 %v553, %v802
    %804 = vmatprep.mubr.f32.mxu0 0.0
    %805 = vmatmul.mubr.f32.gmra.mrb[0].mxu0 %v612
    %v806 = vpop.f32.mrb[0].mxu0
    %v807 = vadd.f32 %v549, %v806
    %v808 = vpop.f32.mrb[0].mxu0
    %v809 = vadd.f32 %v553, %v808
    %810 = vmatprep.mubr.f32.mxu0 0.0
    %811 = vmatmul.mubr.f32.gmra.mrb[0].mxu0 %v615
    %v812 = vpop.f32.mrb[0].mxu0
    %v813 = vadd.f32 %v549, %v812
    %v814 = vpop.f32.mrb[0].mxu0
    %v815 = vadd.f32 %v553, %v814
    %816 = vmatprep.mubr.f32.mxu0 0.0
    %817 = vmatmul.mubr.f32.gmra.mrb[0].mxu0 %v618
    %v818 = vpop.f32.mrb[0].mxu0
    %v819 = vadd.f32 %v549, %v818
    %v820 = vpop.f32.mrb[0].mxu0
    %v821 = vadd.f32 %v553, %v820
    %822 = vmatprep.mubr.f32.mxu0 0.0
    %823 = vmatmul.mubr.f32.gmra.mrb[0].mxu0 %v621
    %v824 = vpop.f32.mrb[0].mxu0
    %v825 = vadd.f32 %v549, %v824
    %v826 = vpop.f32.mrb[0].mxu0
    %v827 = vadd.f32 %v553, %v826
    %828 = vmatprep.mubr.f32.mxu0 0.0
    %829 = vmatmul.mubr.f32.gmra.mrb[0].mxu0 %v624
    %v830 = vpop.f32.mrb[0].mxu0
    %v831 = vadd.f32 %v549, %v830
    %v832 = vpop.f32.mrb[0].mxu0
    %v833 = vadd.f32 %v553, %v832
    %834 = vmatprep.mubr.f32.mxu0 0.0
    %835 = vmatmul.mubr.f32.gmra.mrb[0].mxu0 %v627
    %v836 = vpop.f32.mrb[0].mxu0
    %v837 = vadd.f32 %v549, %v836
    %v838 = vpop.f32.mrb[0].mxu0
    %v839 = vadd.f32 %v553, %v838
    %840 = vmatprep.mubr.f32.mxu0 0.0
    %841 = vmatmul.mubr.f32.gmra.mrb[0].mxu0 %v630
    %v842 = vpop.f32.mrb[0].mxu0
    %v843 = vadd.f32 %v549, %v842
    %v844 = vpop.f32.mrb[0].mxu0
    %v845 = vadd.f32 %v553, %v844
    %846 = vdwg.mxu0
    %v847 = vmul.f32 %v432, %v514
    %v848 = vmul.f32 %v433, %v514
    %v849 = vmul.f32 %v434, %v514
    %v850 = vmul.f32 %v435, %v514
    %v851 = vmul.f32 %v436, %v514
    %v852 = vmul.f32 %v437, %v514
    %v853 = vmul.f32 %v438, %v514
    %v854 = vmul.f32 %v439, %v514
    %v855 = vmul.f32 %v440, %v514
    %v856 = vmul.f32 %v441, %v514
    %v857 = vmul.f32 %v442, %v514
    %v858 = vmul.f32 %v443, %v514
    %v859 = vmul.f32 %v444, %v514
    %v860 = vmul.f32 %v445, %v514
    %v861 = vmul.f32 %v446, %v514
    %v862 = vmul.f32 %v447, %v514
    %v863 = vmul.f32 %v448, %v514
    %v864 = vmul.f32 %v449, %v514
    %v865 = vmul.f32 %v450, %v514
    %v866 = vmul.f32 %v451, %v514
    %v867 = vmul.f32 %v452, %v514
    %v868 = vmul.f32 %v453, %v514
    %v869 = vmul.f32 %v454, %v514
    %v870 = vmul.f32 %v455, %v514
    %v871 = vmul.f32 %v456, %v514
    %v872 = vmul.f32 %v699, %v847
    %v873 = vmul.f32 %v705, %v848
    %v874 = vmul.f32 %v711, %v849
    %v875 = vmul.f32 %v717, %v850
    %v876 = vmul.f32 %v723, %v851
    %v877 = vmul.f32 %v729, %v852
    %v878 = vmul.f32 %v735, %v853
    %v879 = vmul.f32 %v741, %v854
    %v880 = vmul.f32 %v747, %v855
    %v881 = vmul.f32 %v753, %v856
    %v882 = vmul.f32 %v759, %v857
    %v883 = vmul.f32 %v765, %v858
    %v884 = vmul.f32 %v771, %v859
    %v885 = vmul.f32 %v777, %v860
    %v886 = vmul.f32 %v783, %v861
    %v887 = vmul.f32 %v789, %v862
    %v888 = vmul.f32 %v795, %v863
    %v889 = vmul.f32 %v801, %v864
    %v890 = vmul.f32 %v807, %v865
    %v891 = vmul.f32 %v813, %v866
    %v892 = vmul.f32 %v819, %v867
    %v893 = vmul.f32 %v825, %v868
    %v894 = vmul.f32 %v831, %v869
    %v895 = vmul.f32 %v837, %v870
    %v896 = vmul.f32 %v843, %v871
    %v897 = vadd.f32 %v872, %v701
    %v898 = vadd.f32 %v873, %v707
    %v899 = vadd.f32 %v874, %v713
    %v900 = vadd.f32 %v875, %v719
    %v901 = vadd.f32 %v876, %v725
    %v902 = vadd.f32 %v877, %v731
    %v903 = vadd.f32 %v878, %v737
    %v904 = vadd.f32 %v879, %v743
    %v905 = vadd.f32 %v880, %v749
    %v906 = vadd.f32 %v881, %v755
    %v907 = vadd.f32 %v882, %v761
    %v908 = vadd.f32 %v883, %v767
    %v909 = vadd.f32 %v884, %v773
    %v910 = vadd.f32 %v885, %v779
    %v911 = vadd.f32 %v886, %v785
    %v912 = vadd.f32 %v887, %v791
    %v913 = vadd.f32 %v888, %v797
    %v914 = vadd.f32 %v889, %v803
    %v915 = vadd.f32 %v890, %v809
    %v916 = vadd.f32 %v891, %v815
    %v917 = vadd.f32 %v892, %v821
    %v918 = vadd.f32 %v893, %v827
    %v919 = vadd.f32 %v894, %v833
    %v920 = vadd.f32 %v895, %v839
    %v921 = vadd.f32 %v896, %v845
    %922 = vst [vmem:[#allocation2] sm:$0xff] %v897
    %923 = vst [vmem:[#allocation2 + $0x8] sm:$0xff] %v898
    %924 = vst [vmem:[#allocation2 + $0x10] sm:$0xff] %v899
    %925 = vst [vmem:[#allocation2 + $0x18] sm:$0xff] %v900
    %926 = vst [vmem:[#allocation2 + $0x20] sm:$0xff] %v901
    %927 = vst [vmem:[#allocation2 + $0x28] sm:$0xff] %v902
    %928 = vst [vmem:[#allocation2 + $0x30] sm:$0xff] %v903
    %929 = vst [vmem:[#allocation2 + $0x38] sm:$0xff] %v904
    %930 = vst [vmem:[#allocation2 + $0x40] sm:$0xff] %v905
    %931 = vst [vmem:[#allocation2 + $0x48] sm:$0xff] %v906
    %932 = vst [vmem:[#allocation2 + $0x50] sm:$0xff] %v907
    %933 = vst [vmem:[#allocation2 + $0x58] sm:$0xff] %v908
    %934 = vst [vmem:[#allocation2 + $0x60] sm:$0xff] %v909
    %935 = vst [vmem:[#allocation2 + $0x68] sm:$0xff] %v910
    %936 = vst [vmem:[#allocation2 + $0x70] sm:$0xff] %v911
    %937 = vst [vmem:[#allocation2 + $0x78] sm:$0xff] %v912
    %938 = vst [vmem:[#allocation2 + $0x80] sm:$0xff] %v913
    %939 = vst [vmem:[#allocation2 + $0x88] sm:$0xff] %v914
    %940 = vst [vmem:[#allocation2 + $0x90] sm:$0xff] %v915
    %941 = vst [vmem:[#allocation2 + $0x98] sm:$0xff] %v916
    %942 = vst [vmem:[#allocation2 + $0xa0] sm:$0xff] %v917
    %943 = vst [vmem:[#allocation2 + $0xa8] sm:$0xff] %v918
    %944 = vst [vmem:[#allocation2 + $0xb0] sm:$0xff] %v919
    %945 = vst [vmem:[#allocation2 + $0xb8] sm:$0xff] %v920
    %946 = vst [vmem:[#allocation2 + $0xc0] sm:$0xff] %v921
    // Predicated region
    $region26: #{tpu_custom_call.1} parent=1 // pred_check
      _
    $region27: #{tpu_custom_call.1} parent=1 // pred_check_branch
      %948 = sbr.rel (0) target = $region29
    $region28: #{tpu_custom_call.1} parent=1 // pred_region
      %s950 = ssub.s32 3200, 3200
      %951 = vsyncadd [#allocation3], %s950
      %s952 = sshll.u32 [#allocation2], 4
      %s953 = int_to_ptr.vmem [resolvable:$true] %s952
      %958 = dma.vmem_to_hbm [thread:$0]  %s953, 3200, %s6, [#allocation3], 128, 128, 8
    $region29: #{tpu_custom_call.1} parent=1 // pred_fallthru
      _
    // Predicated region
    $region30: #{tpu_custom_call.1} parent=1 // pred_check
      _
    $region31: #{tpu_custom_call.1} parent=1 // pred_check_branch
      %960 = sbr.rel (0) target = $region33
    $region32: #{tpu_custom_call.1} parent=1 // pred_region
      %961 = dma.done [#allocation3], 3200
    $region33: #{tpu_custom_call.1} parent=1 // pred_fallthru
      _
    %962 = vsyncpa [#allocation3], 1

</llo_original>
